<compile_context>
chip_gen: v7x
topology: tpu7x:2x2x1
jax: 0.10.0
libtpu: 0.0.40
codegen_flags: <defaults>
</compile_context>

<pallas_src>
import functools

import jax
import jax.numpy as jnp
from jax.experimental import pallas as pl
from jax.experimental.pallas import tpu as pltpu


# ---------------------------------------------------------------------------
# Kernel
# ---------------------------------------------------------------------------

def _head_kernel(eps,
                 h_ref, f_ref,
                 wt_ref, psm_ref, w1h_ref, w1f_ref, w2_ref,
                 wd_ref, bd_ref,
                 o_ref, act_ref):
    """One (row tile i, vocab group g, vocab tile j) grid point."""

    # ---- pre-vocab chain: compute once per (row tile, group) at j == 0 ----
    @pl.when(pl.program_id(2) == 0)
    def _compute_activation():
        bt    = psm_ref[0:1, :]
        gamma = psm_ref[1:2, :]
        beta  = psm_ref[2:3, :]
        b1    = psm_ref[3:4, :]
        b2    = psm_ref[4:5, :]

        # BertPredictionHeadTransform: Linear -> GELU(exact) -> LayerNorm
        x = jnp.dot(h_ref[...], wt_ref[...],
                    preferred_element_type=jnp.float32) + bt
        # exact GELU (nn.GELU default): 0.5*x*(1+erf(x/sqrt(2)))
        x = 0.5 * x * (1.0 + jax.lax.erf(x * 0.7071067811865476))
        mean = jnp.mean(x, axis=-1, keepdims=True)
        var = jnp.mean(jnp.square(x - mean), axis=-1, keepdims=True)
        x = (x - mean) * jax.lax.rsqrt(var + eps)
        x = x * gamma + beta

        # decoder_1 on cat((x, added_futures), -1), then ReLU.
        #   cat(x, f) @ W1.T == x @ W1h + f @ W1f  (weights pre-transposed/split)
        x = (jnp.dot(x.astype(w1h_ref.dtype), w1h_ref[...],
                     preferred_element_type=jnp.float32)
             + jnp.dot(f_ref[...], w1f_ref[...],
                       preferred_element_type=jnp.float32)
             + b1)
        x = jnp.maximum(x, 0.0)
        # TODO(synk): dropout_1 (p=0.3) is identity (eval-mode semantics).

        # decoder_2, then ReLU.
        x = jnp.dot(x.astype(w2_ref.dtype), w2_ref[...],
                    preferred_element_type=jnp.float32) + b2
        x = jnp.maximum(x, 0.0)
        # TODO(synk): dropout_2 (p=0.3) is identity (eval-mode semantics).

        act_ref[...] = x.astype(act_ref.dtype)

    # ---- decoder: vocab projection for this vocab tile + tied bias ----
    out = jnp.dot(act_ref[...], wd_ref[...],
                  preferred_element_type=jnp.float32) + bd_ref[...]
    o_ref[...] = out.astype(o_ref.dtype)


# ---------------------------------------------------------------------------
# Helpers
# ---------------------------------------------------------------------------

def _cdiv(a, b):
    return -(-a // b)


def _round_up(x, m):
    return _cdiv(x, m) * m


def _pad_rows(x, rows):
    if x.shape[0] == rows:
        return x
    return jnp.pad(x, ((0, rows - x.shape[0]), (0, 0)))


def _pad_cols(x, cols):
    if x.shape[1] == cols:
        return x
    return jnp.pad(x, ((0, 0), (0, cols - x.shape[1])))


def _choose_row_tile(M, tm):
    """Balanced, MXU-aligned row tiling. Returns (tm, Mp, n_row_tiles)."""
    align = 256 if (tm >= 256 and M >= 256) else 8   # 256-align for real sizes
    tm = max(align, (tm // align) * align)
    Ma = _round_up(M, align)
    n = _cdiv(Ma, tm)
    tm = _round_up(_cdiv(Ma, n), align)              # balance -> Mp == M when
    Mp = n * tm                                      # M is align-multiple
    return tm, Mp, n


def _choose_vocab_tile(V, tv):
    """Lane/MXU-aligned vocab tiling. Returns (tv, Vp)."""
    align = 256 if (tv >= 256 and V >= 256) else 128
    tv = max(align, (tv // align) * align)
    Vp = _round_up(V, align)
    n = _cdiv(Vp, tv)
    tv = _round_up(_cdiv(Vp, n), align)
    Vp = n * tv
    return tv, Vp


def _vmem_limit_bytes(tm, tv, H, NF, compute_dtype, out_dtype, single_buf):
    """Tile-size-aware VMEM budget, capped at 75% of this chip's capacity."""
    cdb = jnp.dtype(compute_dtype).itemsize
    ob = jnp.dtype(out_dtype).itemsize
    wbuf = 1 if single_buf else 2
    est = 0
    est += 2 * tm * H * cdb                               # hidden rows (x2 buf)
    est += 2 * tm * max(NF, 128) * cdb                    # futures rows
    est += wbuf * (3 * H * H + max(NF, 8) * H) * cdb      # wt, w1h, w2, w1f
    est += wbuf * 8 * H * 4                               # packed small params
    est += 2 * H * tv * cdb                               # decoder-weight tile
    est += 2 * 8 * tv * 4                                 # decoder-bias tile
    est += 2 * tm * tv * ob                               # output tile
    est += tm * H * cdb                                   # activation scratch
    est += 3 * tm * H * 4                                 # f32 temporaries (j==0)
    try:
        cap = int(pltpu.get_tpu_info().vmem_capacity_bytes)
    except Exception:
        cap = 64 * 1024 * 1024                            # assume v7x (smallest)
    return int(min(0.75 * cap, max(32 * 1024 * 1024, 1.25 * est)))


@functools.lru_cache(maxsize=None)
def _single_buffer_supported():
    """Explicit feature probe: can constant-index blocks use pl.Buffered(1)?

    Compiles a tiny throwaway kernel once; real-kernel compile errors are
    never masked by this check.
    """
    if not hasattr(pl, "Buffered"):
        return False
    try:
        spec = pl.BlockSpec((8, 128), lambda i: (0, 0),
                            pipeline_mode=pl.Buffered(1))

        def _probe(x_ref, o_ref):
            o_ref[...] = x_ref[...] + 1.0

        probe = pl.pallas_call(
            _probe,
            out_shape=jax.ShapeDtypeStruct((8, 128), jnp.float32),
            grid_spec=pltpu.PrefetchScalarGridSpec(
                num_scalar_prefetch=0, grid=(1,),
                in_specs=[spec],
                out_specs=pl.BlockSpec((8, 128), lambda i: (0, 0))),
        )
        jax.jit(probe).lower(
            jax.ShapeDtypeStruct((8, 128), jnp.float32)).compile()
        return True
    except Exception:
        return False


# ---------------------------------------------------------------------------
# One-time weight preprocessing (hoisted out of the per-call path)
# ---------------------------------------------------------------------------

def prepare_bert_lm_head_params(params, *, compute_dtype=jnp.bfloat16,
                                vocab_tile=1024):
    """Cast / pad / split / pack the head weights ONCE; cache the result.

    Raw params (all weights pre-transposed to [in, out]):
      wt (H,H), bt (1,H), gamma (1,H), beta (1,H),
      w1 (H+NF, H)  [or already-split w1h (H,H) + w1f (NF,H)],
      b1 (1,H), w2 (H,H), b2 (1,H), wd (H,V), bd (1,V)
    """
    H = params["wt"].shape[0]
    V = params["wd"].shape[1]
    if "w1" in params:
        w1h, w1f = params["w1"][:H], params["w1"][H:]
    else:
        w1h, w1f = params["w1h"], params["w1f"]
    NF = w1f.shape[0]
    cd = jnp.dtype(compute_dtype)
    tv, Vp = _choose_vocab_tile(V, vocab_tile)

    # Pack the five (1,H) f32 params into one full-sublane (8,H) block:
    # rows 0..4 = bt, gamma, beta, b1, b2 (one DMA instead of five).
    psm = jnp.zeros((8, H), jnp.float32)
    for r, name in enumerate(("bt", "gamma", "beta", "b1", "b2")):
        psm = psm.at[r].set(params[name].reshape(H).astype(jnp.float32))

    return {
        "wt":  params["wt"].astype(cd),
        "w1h": w1h.astype(cd),
        "w1f": w1f.astype(cd),
        "w2":  params["w2"].astype(cd),
        "wd":  _pad_cols(params["wd"].astype(cd), Vp),
        "bd":  _pad_cols(params["bd"].astype(jnp.float32), Vp),
        "p_small": psm,
        "_meta": dict(H=H, NF=NF, V=V, Vp=Vp, tv=tv, compute_dtype=cd),
    }


# ---------------------------------------------------------------------------
# Forward
# ---------------------------------------------------------------------------

def bert_lm_prediction_head(hidden_states, added_futures, params, *,
                            layer_norm_eps=1e-12,
                            tm=1024, tv=1024,
                            compute_dtype=jnp.bfloat16,
                            out_dtype=None,
                            return_padded=False):
    """Fused BertLMPredictionHead forward.

    `params` may be raw (see prepare_bert_lm_head_params) or, preferably, the
    prepared dict (reuse it across calls: per-call casting/padding of the H x V
    decoder weight costs as much HBM traffic as the kernel itself).
    `out_dtype=jnp.bfloat16` halves the logits writeback (recommended on
    v5e/v6e); default keeps hidden_states.dtype.
    """
    if "_meta" not in params:
        params = prepare_bert_lm_head_params(
            params, compute_dtype=compute_dtype, vocab_tile=tv)
    meta = params["_meta"]
    H, NF, V, Vp, tv = meta["H"], meta["NF"], meta["V"], meta["Vp"], meta["tv"]
    cd = meta["compute_dtype"]

    B, S, _ = hidden_states.shape
    M = B * S
    if out_dtype is None:
        out_dtype = hidden_states.dtype   # prefer bf16 logits on v5e/v6e

    tm, Mp, n_i = _choose_row_tile(M, tm)
    n_j = Vp // tv
    # Vocab groups: when there is only one row tile, split the vocab sweep
    # into 2 'parallel' groups so v7x's second TensorCore has work; the only
    # cost on 1-TC chips is recomputing the cheap pre-vocab chain once more.
    G = 2 if (n_i == 1 and n_j >= 2 and n_j % 2 == 0) else 1
    npg = n_j // G

    h2 = _pad_rows(hidden_states.reshape(M, H).astype(cd), Mp)
    f2 = _pad_rows(added_futures.reshape(M, NF).astype(cd), Mp)

    single_buf = _single_buffer_supported()

    def const_spec(r, c):
        # Constant-index blocks: one VMEM buffer is enough when supported.
        if single_buf:
            return pl.BlockSpec((r, c), lambda i, g, j: (0, 0),
                                pipeline_mode=pl.Buffered(1))
        return pl.BlockSpec((r, c), lambda i, g, j: (0, 0))

    def vocab_idx(i, g, j):
        return (0, g * npg + j)

    def out_idx(i, g, j):
        return (i, g * npg + j)

    vmem_limit = _vmem_limit_bytes(tm, tv, H, NF, cd, out_dtype, single_buf)
    kernel = functools.partial(_head_kernel, float(layer_norm_eps))

    call = pl.pallas_call(
        kernel,
        out_shape=jax.ShapeDtypeStruct((Mp, Vp), out_dtype),
        grid_spec=pltpu.PrefetchScalarGridSpec(
            num_scalar_prefetch=0,
            grid=(n_i, G, npg),
            in_specs=[
                pl.BlockSpec((tm, H), lambda i, g, j: (i, 0)),    # hidden rows
                pl.BlockSpec((tm, NF), lambda i, g, j: (i, 0)),   # futures rows
                const_spec(H, H),     # transform.dense weight (pre-transposed)
                const_spec(8, H),     # packed (bt, gamma, beta, b1, b2), f32
                const_spec(H, H),     # decoder_1 weight, hidden part
                const_spec(NF, H),    # decoder_1 weight, futures part
                const_spec(H, H),     # decoder_2 weight
                pl.BlockSpec((H, tv), vocab_idx),   # decoder weight tile
                pl.BlockSpec((1, tv), vocab_idx),   # decoder (tied) bias tile
            ],
            out_specs=pl.BlockSpec((tm, tv), out_idx),
            # Pre-vocab activation cached across vocab tiles of one (i, g).
            scratch_shapes=[pltpu.VMEM((tm, H), cd)],
        ),
        compiler_params=pltpu.CompilerParams(
            dimension_semantics=("parallel", "parallel", "arbitrary"),
            vmem_limit_bytes=vmem_limit),
    )

    out = call(h2, f2, params["wt"], params["p_small"], params["w1h"],
               params["w1f"], params["w2"], params["wd"], params["bd"])

    if return_padded:
        return out                       # [Mp, Vp]; rows >= M / cols >= V pad
    if Mp == M and Vp == V:
        return out.reshape(B, S, V)      # contiguous reshape, no copy
    # NOTE: this slice materializes a logits copy; prefer return_padded=True
    # and masking the padded vocab columns in the downstream softmax/loss.
    return out[:M, :V].reshape(B, S, V)


# ---------------------------------------------------------------------------
# Reference + self-test
# ---------------------------------------------------------------------------

def _reference(hidden_states, added_futures, params, eps):
    x = hidden_states @ params["wt"] + params["bt"]
    x = 0.5 * x * (1.0 + jax.lax.erf(x / jnp.sqrt(2.0)))
    mean = jnp.mean(x, axis=-1, keepdims=True)
    var = jnp.mean(jnp.square(x - mean), axis=-1, keepdims=True)
    x = (x - mean) * jax.lax.rsqrt(var + eps) * params["gamma"] + params["beta"]
    x = jnp.concatenate([x, added_futures], axis=2)
    x = jnp.maximum(x @ params["w1"] + params["b1"], 0.0)
    x = jnp.maximum(x @ params["w2"] + params["b2"], 0.0)
    return x @ params["wd"] + params["bd"]


if __name__ == "__main__":
    # Small, deterministic configuration. S=12 (-> 24 rows) exercises row
    # padding; V=256 exercises multi-vocab-tile and vocab-group paths.
    B, S, H, NF, V = 2, 12, 32, 4, 256
    layer_norm_eps = 1e-12

    key = jax.random.PRNGKey(0)
    keys = jax.random.split(key, 9)

    def init(k, shape, scale=0.1):
        return (scale * jax.random.normal(k, shape)).astype(jnp.float32)

    # All weights stored pre-transposed ([in, out]) so the kernel does x @ W.
    params = {
        "wt":    init(keys[0], (H, H)),
        "bt":    init(keys[1], (1, H)),
        "gamma": jnp.ones((1, H), jnp.float32),
        "beta":  jnp.zeros((1, H), jnp.float32),
        "w1":    init(keys[2], (H + NF, H)),      # decoder_1 weight (split in prepare)
        "b1":    init(keys[3], (1, H)),
        "w2":    init(keys[4], (H, H)),
        "b2":    init(keys[5], (1, H)),
        "wd":    init(keys[6], (H, V)),
        "bd":    jnp.zeros((1, V), jnp.float32),  # self.bias = zeros(vocab_size)
    }

    hidden_states = jax.random.normal(keys[7], (B, S, H), jnp.float32)
    added_futures = jax.random.normal(keys[8], (B, S, NF), jnp.float32)

    ref = _reference(hidden_states, added_futures, params, layer_norm_eps)

    # 1) f32 compute / f32 logits, small test tiles: grid (2,1,2) with row
    #    padding 24 -> 32, exercising j==0 scratch reuse + output slicing.
    prep_f32 = prepare_bert_lm_head_params(
        params, compute_dtype=jnp.float32, vocab_tile=128)
    out = bert_lm_prediction_head(
        hidden_states, added_futures, prep_f32,
        layer_norm_eps=layer_norm_eps, tm=16)
    out = jax.block_until_ready(out)
    assert out.shape == (B, S, V), out.shape
    assert jnp.allclose(out, ref, atol=2e-2, rtol=2e-2), "f32 mismatch (tiled)"

    # 2) f32, single row tile -> vocab-group (megacore) path: grid (1,2,1),
    #    Mp == M so the unpadded/no-copy return path is taken.
    out = bert_lm_prediction_head(
        hidden_states, added_futures, prep_f32,
        layer_norm_eps=layer_norm_eps, tm=1024)
    out = jax.block_until_ready(out)
    assert out.shape == (B, S, V), out.shape
    assert jnp.allclose(out, ref, atol=2e-2, rtol=2e-2), "f32 mismatch (grouped)"

    # 3) Production-style configuration: bf16 weights/activations (f32 accum),
    #    bf16 logits, default (large) tiles, prepared params reused.
    prep_bf16 = prepare_bert_lm_head_params(params, compute_dtype=jnp.bfloat16)
    out_bf16 = bert_lm_prediction_head(
        hidden_states, added_futures, prep_bf16,
        layer_norm_eps=layer_norm_eps, out_dtype=jnp.bfloat16)
    out_bf16 = jax.block_until_ready(out_bf16)
    assert out_bf16.shape == (B, S, V), out_bf16.shape
    assert jnp.allclose(out_bf16.astype(jnp.float32), ref,
                        atol=1e-1, rtol=1e-1), "bf16 mismatch vs reference"

    print("KERNEL_OK")
</pallas_src>

<mosaic_0001>
module attributes {stable_mosaic.version = 11 : i64} {
  func.func @_head_kernel(%arg0: i32, %arg1: i32, %arg2: i32, %arg3: memref<16x32xf32, #tpu.memory_space<vmem>>, %arg4: memref<16x4xf32, #tpu.memory_space<vmem>>, %arg5: memref<32x32xf32, #tpu.memory_space<vmem>>, %arg6: memref<8x32xf32, #tpu.memory_space<vmem>>, %arg7: memref<32x32xf32, #tpu.memory_space<vmem>>, %arg8: memref<4x32xf32, #tpu.memory_space<vmem>>, %arg9: memref<32x32xf32, #tpu.memory_space<vmem>>, %arg10: memref<32x128xf32, #tpu.memory_space<vmem>>, %arg11: memref<1x128xf32, #tpu.memory_space<vmem>>, %arg12: memref<16x128xf32, #tpu.memory_space<vmem>>, %arg13: memref<16x32xf32, #tpu.memory_space<vmem>>) attributes {dimension_semantics = [#tpu.dimension_semantics<parallel>, #tpu.dimension_semantics<parallel>, #tpu.dimension_semantics<arbitrary>], iteration_bounds = array<i64: 2, 1, 2>, scalar_prefetch = 0 : i64, scratch_operands = 1 : i64, tpu.core_type = #tpu.core_type<tc>, window_params = [{transform_indices = @transform_0, window_bounds = array<i64: 16, 32>}, {transform_indices = @transform_1, window_bounds = array<i64: 16, 4>}, {pipeline_mode = #tpu.pipeline_mode<synchronous>, transform_indices = @transform_2, window_bounds = array<i64: 32, 32>}, {pipeline_mode = #tpu.pipeline_mode<synchronous>, transform_indices = @transform_3, window_bounds = array<i64: 8, 32>}, {pipeline_mode = #tpu.pipeline_mode<synchronous>, transform_indices = @transform_4, window_bounds = array<i64: 32, 32>}, {pipeline_mode = #tpu.pipeline_mode<synchronous>, transform_indices = @transform_5, window_bounds = array<i64: 4, 32>}, {pipeline_mode = #tpu.pipeline_mode<synchronous>, transform_indices = @transform_6, window_bounds = array<i64: 32, 32>}, {transform_indices = @transform_7, window_bounds = array<i64: 32, 128>}, {transform_indices = @transform_8, window_bounds = array<i64: 1, 128>}, {transform_indices = @transform_9, window_bounds = array<i64: 16, 128>}]} {
    %c0_i32 = arith.constant 0 : i32
    %0 = arith.cmpi eq, %arg2, %c0_i32 : i32
    %1 = arith.extui %0 : i1 to i32
    %c0_i32_0 = arith.constant 0 : i32
    %2 = arith.cmpi ne, %1, %c0_i32_0 : i32
    scf.if %2 {
      %c0_8 = arith.constant 0 : index
      %c0_9 = arith.constant 0 : index
      %10 = vector.load %arg6[%c0_8, %c0_9] : memref<8x32xf32, #tpu.memory_space<vmem>>, vector<1x32xf32>
      %c1 = arith.constant 1 : index
      %c0_10 = arith.constant 0 : index
      %11 = vector.load %arg6[%c1, %c0_10] : memref<8x32xf32, #tpu.memory_space<vmem>>, vector<1x32xf32>
      %c2 = arith.constant 2 : index
      %c0_11 = arith.constant 0 : index
      %12 = vector.load %arg6[%c2, %c0_11] : memref<8x32xf32, #tpu.memory_space<vmem>>, vector<1x32xf32>
      %c3 = arith.constant 3 : index
      %c0_12 = arith.constant 0 : index
      %13 = vector.load %arg6[%c3, %c0_12] : memref<8x32xf32, #tpu.memory_space<vmem>>, vector<1x32xf32>
      %c4 = arith.constant 4 : index
      %c0_13 = arith.constant 0 : index
      %14 = vector.load %arg6[%c4, %c0_13] : memref<8x32xf32, #tpu.memory_space<vmem>>, vector<1x32xf32>
      %c0_14 = arith.constant 0 : index
      %c0_15 = arith.constant 0 : index
      %15 = vector.load %arg3[%c0_14, %c0_15] : memref<16x32xf32, #tpu.memory_space<vmem>>, vector<16x32xf32>
      %c0_16 = arith.constant 0 : index
      %c0_17 = arith.constant 0 : index
      %16 = vector.load %arg5[%c0_16, %c0_17] : memref<32x32xf32, #tpu.memory_space<vmem>>, vector<32x32xf32>
      %cst_18 = arith.constant dense<0.000000e+00> : vector<16x32xf32>
      %17 = tpu.matmul %15, %16, %cst_18 {dimension_numbers = #tpu.dot_dimension_numbers<[1], [0], [0], [1], [0, 0, 1, 1], [], []>} : vector<16x32xf32>, vector<32x32xf32>, vector<16x32xf32> -> vector<16x32xf32>
      %18 = vector.broadcast %10 : vector<1x32xf32> to vector<16x32xf32>
      %19 = arith.addf %17, %18 : vector<16x32xf32>
      %cst_19 = arith.constant 5.000000e-01 : f32
      %20 = vector.broadcast %cst_19 : f32 to vector<16x32xf32>
      %21 = arith.mulf %20, %19 : vector<16x32xf32>
      %cst_20 = arith.constant 0.707106769 : f32
      %22 = vector.broadcast %cst_20 : f32 to vector<16x32xf32>
      %23 = arith.mulf %19, %22 : vector<16x32xf32>
      %24 = math.erf %23 : vector<16x32xf32>
      %cst_21 = arith.constant 1.000000e+00 : f32
      %25 = vector.broadcast %cst_21 : f32 to vector<16x32xf32>
      %26 = arith.addf %25, %24 : vector<16x32xf32>
      %27 = arith.mulf %21, %26 : vector<16x32xf32>
      %cst_22 = arith.constant dense<0.000000e+00> : vector<16xf32>
      %28 = vector.multi_reduction <add>, %27, %cst_22 [1] : vector<16x32xf32> to vector<16xf32>
      %29 = vector.shape_cast %28 : vector<16xf32> to vector<16x1xf32>
      %cst_23 = arith.constant 3.200000e+01 : f32
      %30 = vector.broadcast %cst_23 : f32 to vector<16x1xf32>
      %31 = arith.divf %29, %30 : vector<16x1xf32>
      %32 = vector.broadcast %31 : vector<16x1xf32> to vector<16x32xf32>
      %33 = arith.subf %27, %32 : vector<16x32xf32>
      %34 = arith.mulf %33, %33 : vector<16x32xf32>
      %cst_24 = arith.constant dense<0.000000e+00> : vector<16xf32>
      %35 = vector.multi_reduction <add>, %34, %cst_24 [1] : vector<16x32xf32> to vector<16xf32>
      %36 = vector.shape_cast %35 : vector<16xf32> to vector<16x1xf32>
      %cst_25 = arith.constant 3.200000e+01 : f32
      %37 = vector.broadcast %cst_25 : f32 to vector<16x1xf32>
      %38 = arith.divf %36, %37 : vector<16x1xf32>
      %39 = vector.broadcast %31 : vector<16x1xf32> to vector<16x32xf32>
      %40 = arith.subf %27, %39 : vector<16x32xf32>
      %cst_26 = arith.constant 9.99999996E-13 : f32
      %41 = vector.broadcast %cst_26 : f32 to vector<16x1xf32>
      %42 = arith.addf %38, %41 : vector<16x1xf32>
      %43 = math.rsqrt %42 : vector<16x1xf32>
      %44 = vector.broadcast %43 : vector<16x1xf32> to vector<16x32xf32>
      %45 = arith.mulf %40, %44 : vector<16x32xf32>
      %46 = vector.broadcast %11 : vector<1x32xf32> to vector<16x32xf32>
      %47 = arith.mulf %45, %46 : vector<16x32xf32>
      %48 = vector.broadcast %12 : vector<1x32xf32> to vector<16x32xf32>
      %49 = arith.addf %47, %48 : vector<16x32xf32>
      %c0_27 = arith.constant 0 : index
      %c0_28 = arith.constant 0 : index
      %50 = vector.load %arg7[%c0_27, %c0_28] : memref<32x32xf32, #tpu.memory_space<vmem>>, vector<32x32xf32>
      %cst_29 = arith.constant dense<0.000000e+00> : vector<16x32xf32>
      %51 = tpu.matmul %49, %50, %cst_29 {dimension_numbers = #tpu.dot_dimension_numbers<[1], [0], [0], [1], [0, 0, 1, 1], [], []>} : vector<16x32xf32>, vector<32x32xf32>, vector<16x32xf32> -> vector<16x32xf32>
      %c0_30 = arith.constant 0 : index
      %c0_31 = arith.constant 0 : index
      %52 = vector.load %arg4[%c0_30, %c0_31] : memref<16x4xf32, #tpu.memory_space<vmem>>, vector<16x4xf32>
      %c0_32 = arith.constant 0 : index
      %c0_33 = arith.constant 0 : index
      %53 = vector.load %arg8[%c0_32, %c0_33] : memref<4x32xf32, #tpu.memory_space<vmem>>, vector<4x32xf32>
      %cst_34 = arith.constant dense<0.000000e+00> : vector<16x32xf32>
      %54 = tpu.matmul %52, %53, %cst_34 {dimension_numbers = #tpu.dot_dimension_numbers<[1], [0], [0], [1], [0, 0, 1, 1], [], []>} : vector<16x4xf32>, vector<4x32xf32>, vector<16x32xf32> -> vector<16x32xf32>
      %55 = arith.addf %51, %54 : vector<16x32xf32>
      %56 = vector.broadcast %13 : vector<1x32xf32> to vector<16x32xf32>
      %57 = arith.addf %55, %56 : vector<16x32xf32>
      %cst_35 = arith.constant 0.000000e+00 : f32
      %58 = vector.broadcast %cst_35 : f32 to vector<16x32xf32>
      %59 = arith.maximumf %57, %58 : vector<16x32xf32>
      %c0_36 = arith.constant 0 : index
      %c0_37 = arith.constant 0 : index
      %60 = vector.load %arg9[%c0_36, %c0_37] : memref<32x32xf32, #tpu.memory_space<vmem>>, vector<32x32xf32>
      %cst_38 = arith.constant dense<0.000000e+00> : vector<16x32xf32>
      %61 = tpu.matmul %59, %60, %cst_38 {dimension_numbers = #tpu.dot_dimension_numbers<[1], [0], [0], [1], [0, 0, 1, 1], [], []>} : vector<16x32xf32>, vector<32x32xf32>, vector<16x32xf32> -> vector<16x32xf32>
      %62 = vector.broadcast %14 : vector<1x32xf32> to vector<16x32xf32>
      %63 = arith.addf %61, %62 : vector<16x32xf32>
      %cst_39 = arith.constant 0.000000e+00 : f32
      %64 = vector.broadcast %cst_39 : f32 to vector<16x32xf32>
      %65 = arith.maximumf %63, %64 : vector<16x32xf32>
      %c0_40 = arith.constant 0 : index
      %c0_41 = arith.constant 0 : index
      %66 = vector.load %arg13[%c0_40, %c0_41] : memref<16x32xf32, #tpu.memory_space<vmem>>, vector<16x32xf32>
      tpu.vector_store %arg13[%c0_40, %c0_41], %65 {strides = array<i32>} : memref<16x32xf32, #tpu.memory_space<vmem>>, vector<16x32xf32>,
    } else {
    }
    %c0 = arith.constant 0 : index
    %c0_1 = arith.constant 0 : index
    %3 = vector.load %arg13[%c0, %c0_1] : memref<16x32xf32, #tpu.memory_space<vmem>>, vector<16x32xf32>
    %c0_2 = arith.constant 0 : index
    %c0_3 = arith.constant 0 : index
    %4 = vector.load %arg10[%c0_2, %c0_3] : memref<32x128xf32, #tpu.memory_space<vmem>>, vector<32x128xf32>
    %cst = arith.constant dense<0.000000e+00> : vector<16x128xf32>
    %5 = tpu.matmul %3, %4, %cst {dimension_numbers = #tpu.dot_dimension_numbers<[1], [0], [0], [1], [0, 0, 1, 1], [], []>} : vector<16x32xf32>, vector<32x128xf32>, vector<16x128xf32> -> vector<16x128xf32>
    %c0_4 = arith.constant 0 : index
    %c0_5 = arith.constant 0 : index
    %6 = vector.load %arg11[%c0_4, %c0_5] : memref<1x128xf32, #tpu.memory_space<vmem>>, vector<1x128xf32>
    %7 = vector.broadcast %6 : vector<1x128xf32> to vector<16x128xf32>
    %8 = arith.addf %5, %7 : vector<16x128xf32>
    %c0_6 = arith.constant 0 : index
    %c0_7 = arith.constant 0 : index
    %9 = vector.load %arg12[%c0_6, %c0_7] : memref<16x128xf32, #tpu.memory_space<vmem>>, vector<16x128xf32>
    tpu.vector_store %arg12[%c0_6, %c0_7], %8 {strides = array<i32>} : memref<16x128xf32, #tpu.memory_space<vmem>>, vector<16x128xf32>,
    return
  }
  func.func @transform_0(%arg0: i32, %arg1: i32, %arg2: i32) -> (i32, i32) {
    %c0_i32 = arith.constant 0 : i32
    %c0_i32_0 = arith.constant 0 : i32
    return %arg0, %c0_i32 : i32, i32
  }
  func.func @transform_1(%arg0: i32, %arg1: i32, %arg2: i32) -> (i32, i32) {
    %c0_i32 = arith.constant 0 : i32
    %c0_i32_0 = arith.constant 0 : i32
    return %arg0, %c0_i32 : i32, i32
  }
  func.func @transform_2(%arg0: i32, %arg1: i32, %arg2: i32) -> (i32, i32) {
    %c0_i32 = arith.constant 0 : i32
    %c0_i32_0 = arith.constant 0 : i32
    %c0_i32_1 = arith.constant 0 : i32
    return %c0_i32, %c0_i32_0 : i32, i32
  }
  func.func @transform_3(%arg0: i32, %arg1: i32, %arg2: i32) -> (i32, i32) {
    %c0_i32 = arith.constant 0 : i32
    %c0_i32_0 = arith.constant 0 : i32
    %c0_i32_1 = arith.constant 0 : i32
    return %c0_i32, %c0_i32_0 : i32, i32
  }
  func.func @transform_4(%arg0: i32, %arg1: i32, %arg2: i32) -> (i32, i32) {
    %c0_i32 = arith.constant 0 : i32
    %c0_i32_0 = arith.constant 0 : i32
    %c0_i32_1 = arith.constant 0 : i32
    return %c0_i32, %c0_i32_0 : i32, i32
  }
  func.func @transform_5(%arg0: i32, %arg1: i32, %arg2: i32) -> (i32, i32) {
    %c0_i32 = arith.constant 0 : i32
    %c0_i32_0 = arith.constant 0 : i32
    %c0_i32_1 = arith.constant 0 : i32
    return %c0_i32, %c0_i32_0 : i32, i32
  }
  func.func @transform_6(%arg0: i32, %arg1: i32, %arg2: i32) -> (i32, i32) {
    %c0_i32 = arith.constant 0 : i32
    %c0_i32_0 = arith.constant 0 : i32
    %c0_i32_1 = arith.constant 0 : i32
    return %c0_i32, %c0_i32_0 : i32, i32
  }
  func.func @transform_7(%arg0: i32, %arg1: i32, %arg2: i32) -> (i32, i32) {
    %c2_i32 = arith.constant 2 : i32
    %0 = arith.muli %arg1, %c2_i32 : i32
    %1 = arith.addi %0, %arg2 : i32
    %c0_i32 = arith.constant 0 : i32
    %c0_i32_0 = arith.constant 0 : i32
    return %c0_i32, %1 : i32, i32
  }
  func.func @transform_8(%arg0: i32, %arg1: i32, %arg2: i32) -> (i32, i32) {
    %c2_i32 = arith.constant 2 : i32
    %0 = arith.muli %arg1, %c2_i32 : i32
    %1 = arith.addi %0, %arg2 : i32
    %c0_i32 = arith.constant 0 : i32
    %c0_i32_0 = arith.constant 0 : i32
    return %c0_i32, %1 : i32, i32
  }
  func.func @transform_9(%arg0: i32, %arg1: i32, %arg2: i32) -> (i32, i32) {
    %c2_i32 = arith.constant 2 : i32
    %0 = arith.muli %arg1, %c2_i32 : i32
    %1 = arith.addi %0, %arg2 : i32
    %c0_i32 = arith.constant 0 : i32
    return %arg0, %1 : i32, i32
  }
}

</mosaic_0001>

<llo_original>
// kernel: tpu_custom_call.1
$region0: #{tpu_custom_call.1}
  #allocation0 [shape = 'u32[]', space=smem, size = 0x4, offset = 0x4, fixed_abs, tag = 'smem constant byte address 0x4 - core index']
  #allocation1 [shape = 'u32[144,128]{1,0:T(1,128)}', space=vmem, size = 0x12000, scoped, tag = 'internal scratch']
  #allocation2 [shape = 'f32[16,32]{1,0:T(8,128)}', space=vmem, size = 0x2000, scoped, tag = 'scratch operand']
  %s0 = inlined_call_operand.vmem [shape: f32[32,32], index: 0, kind: input, shape index: {}]
  %s1 = inlined_call_operand.vmem [shape: f32[32,4], index: 1, kind: input, shape index: {}]
  %s2 = inlined_call_operand.hbm [shape: f32[32,32], index: 2, kind: input, shape index: {}]
  %s3 = inlined_call_operand.vmem [shape: f32[8,32], index: 3, kind: input, shape index: {}]
  %s4 = inlined_call_operand.hbm [shape: f32[32,32], index: 4, kind: input, shape index: {}]
  %s5 = inlined_call_operand.vmem [shape: f32[4,32], index: 5, kind: input, shape index: {}]
  %s6 = inlined_call_operand.hbm [shape: f32[32,32], index: 6, kind: input, shape index: {}]
  %s7 = inlined_call_operand.hbm [shape: f32[32,256], index: 7, kind: input, shape index: {}]
  %s8 = inlined_call_operand.vmem [shape: f32[1,256], index: 8, kind: input, shape index: {}]
  %s9 = inlined_call_operand.hbm [shape: f32[32,256], index: 9, kind: output, shape index: {}]
  %s10 = sld [smem:[#allocation0]]
  $region89: #{tpu_custom_call.1} parent=0
    _
  %s12 = ssub.s32 1, %s10
  %s13 = scalar_select 0, %s12, %s10
  $region1: #{tpu_custom_call.1} parent=0
    #allocation3 [shape = 'u8[16384]{0}', space=vmem, size = 0x4000, scoped, tag = 'input window, operand 2, single buffered']
    #allocation4 [shape = 's32[2]{0}', space=sflag, size = 0x8, scoped, tag = 'scoped memory for tpu_custom_call.1']
    #allocation5 [shape = 's32[2]{0}', space=sflag, size = 0x8, scoped, tag = 'scoped memory for tpu_custom_call.1']
    #allocation6 [shape = 'u8[16384]{0}', space=vmem, size = 0x4000, scoped, tag = 'input window, operand 4, single buffered']
    #allocation7 [shape = 's32[1]{0}', space=sflag, size = 0x4, scoped, tag = 'scoped memory for tpu_custom_call.1']
    #allocation8 [shape = 'u8[16384]{0}', space=vmem, size = 0x4000, scoped, tag = 'input window, operand 6, single buffered']
    #allocation9 [shape = 'u8[32768]{0}', space=vmem, size = 0x8000, scoped, tag = 'input window, operand 7']
    #allocation10 [shape = 's32[2]{0}', space=sflag, size = 0x8, scoped, tag = 'scoped memory for tpu_custom_call.1']
    #allocation11 [shape = 'u8[16384]{0}', space=vmem, size = 0x4000, scoped, tag = 'output window, operand 0']
    %14 = vsyncpa [#allocation4], 0
    %15 = vsyncpa [#allocation7], 0
    %16 = vsyncpa [#allocation10], 0
    %s17 = scalar_lea.sflag [#allocation10], 1
    %18 = vsyncpa %s17, 0
    %19 = vsyncpa [#allocation5], 0
    %s20 = scalar_lea.sflag [#allocation5], 1
    %21 = vsyncpa %s20, 0
    loop: start=0, step=1, limit=6
    $region2: #{tpu_custom_call.1} parent=1 // loop_pre_header
      _
    $region3: #{tpu_custom_call.1} parent=1 // loop_header
      %s23 = sphi 0, %s27
      %p24 = scmp.ge.s32.totalorder %s23, 6
      %s30 = sphi 0, %s49
      %s31 = sphi 0, %s45
      %s32 = sphi 0, %s41
      %s33 = sphi 0, %s30
      %s34 = sphi 0, %s31
      %s35 = sphi 0, %s32
      %s36 = sphi 0, %s33
      %s37 = sphi 0, %s34
      %s38 = sphi 0, %s35
      %s52 = sphi 0, %s54
      %s55 = sphi 0, %s52
      %s56 = sphi 0, %s55
      %s72 = sphi 0, %s56
      %s78 = sphi 0, %s80
      %s81 = sphi 0, %s78
      %s82 = sphi 0, %s81
      %s98 = sphi 0, %s82
      %s102 = sphi 0, %s102
      %s104 = sphi 0, %s102
      %s105 = sphi 0, %s104
      %s119 = sphi 0, %s105
      %s123 = sphi 0, %s123
      %s125 = sphi 0, %s123
      %s126 = sphi 0, %s125
      %s140 = sphi 0, %s126
      %s144 = sphi 0, %s144
      %s146 = sphi 0, %s144
      %s147 = sphi 0, %s146
      %s161 = sphi 0, %s147
      %s165 = sphi 0, %s165
      %s167 = sphi 0, %s165
      %s168 = sphi 0, %s167
      %s182 = sphi 0, %s168
      %s186 = sphi 0, %s186
      %s188 = sphi 0, %s186
      %s189 = sphi 0, %s188
      %s203 = sphi 0, %s189
      %s213 = sphi 0, %s215
      %s216 = sphi 0, %s213
      %s217 = sphi 0, %s216
      %s233 = sphi 0, %s217
      %s243 = sphi 0, %s245
      %s246 = sphi 0, %s243
      %s247 = sphi 0, %s246
      %s263 = sphi 0, %s247
      %s275 = sphi 0, %s277
      %s278 = sphi 0, %s275
      %s279 = sphi 0, %s278
      %s295 = sphi 0, %s279
    $region4: #{tpu_custom_call.1} parent=1 // loop_header_branch
      %26 = sbr.rel (%p24) target = $region8
    $region5: #{tpu_custom_call.1} parent=1 // loop_body
      %s28 = ssub.s32 %s23, 1
      %s29 = ssub.s32 %s23, 2
      %s39 = sadd.s32 1, %s32
      %p40 = scmp.ge.s32.totalorder %s39, 2
      %s41 = scalar_select %p40, 0, %s39
      %s42 = sadd.s32 1, %s31
      %s43 = scalar_select %p40, %s42, %s31
      %p44 = scmp.ge.s32.totalorder %s43, 1
      %s45 = scalar_select %p44, 0, %s43
      %s46 = sadd.s32 1, %s30
      %s47 = scalar_select %p44, %s46, %s30
      %p48 = scmp.ge.s32.totalorder %s47, 2
      %s49 = scalar_select %p48, 0, %s47
      %s50 = ssub.s32 %s30, %s49
      %p51 = scmp.eq.s32.totalorder %s50, 0
      %s53 = sadd.s32 %s52, 1
      %s54 = scalar_select %p51, %s52, %s53
      %p57 = pneg %p51
      %p58 = scmp.eq.s32.totalorder %s23, 3
      %p59 = por %p57, %p58
      %p60 = scmp.ne.s32.totalorder %s52, %s55
      %p61 = scmp.eq.s32.totalorder %s23, 0
      %p62 = por %p60, %p61
      %p63 = scmp.ne.s32.totalorder %s52, %s55
      %p64 = scmp.eq.s32.totalorder %s28, 3
      %p65 = por %p63, %p64
      %p66 = scmp.ne.s32.totalorder %s55, %s56
      %p67 = scmp.eq.s32.totalorder %s28, 0
      %p68 = por %p66, %p67
      %p69 = scmp.ne.s32.totalorder %s55, %s56
      %p70 = scmp.eq.s32.totalorder %s29, 3
      %p71 = por %p69, %p70
      %p73 = scmp.ne.s32.totalorder %s56, %s72
      %p74 = scmp.eq.s32.totalorder %s29, 0
      %p75 = por %p73, %p74
      %s76 = ssub.s32 %s30, %s49
      %p77 = scmp.eq.s32.totalorder %s76, 0
      %s79 = sadd.s32 %s78, 1
      %s80 = scalar_select %p77, %s78, %s79
      %p83 = pneg %p77
      %p84 = scmp.eq.s32.totalorder %s23, 3
      %p85 = por %p83, %p84
      %p86 = scmp.ne.s32.totalorder %s78, %s81
      %p87 = scmp.eq.s32.totalorder %s23, 0
      %p88 = por %p86, %p87
      %p89 = scmp.ne.s32.totalorder %s78, %s81
      %p90 = scmp.eq.s32.totalorder %s28, 3
      %p91 = por %p89, %p90
      %p92 = scmp.ne.s32.totalorder %s81, %s82
      %p93 = scmp.eq.s32.totalorder %s28, 0
      %p94 = por %p92, %p93
      %p95 = scmp.ne.s32.totalorder %s81, %s82
      %p96 = scmp.eq.s32.totalorder %s29, 3
      %p97 = por %p95, %p96
      %p99 = scmp.ne.s32.totalorder %s82, %s98
      %p100 = scmp.eq.s32.totalorder %s29, 0
      %p101 = por %p99, %p100
      %s103 = sadd.s32 %s102, 1
      %p106 = scmp.eq.s32.totalorder %s23, 3
      %p107 = scmp.ne.s32.totalorder %s102, %s104
      %p108 = scmp.eq.s32.totalorder %s23, 0
      %p109 = por %p107, %p108
      %p110 = scmp.ne.s32.totalorder %s102, %s104
      %p111 = scmp.eq.s32.totalorder %s28, 3
      %p112 = por %p110, %p111
      %p113 = scmp.ne.s32.totalorder %s104, %s105
      %p114 = scmp.eq.s32.totalorder %s28, 0
      %p115 = por %p113, %p114
      %p116 = scmp.ne.s32.totalorder %s104, %s105
      %p117 = scmp.eq.s32.totalorder %s29, 3
      %p118 = por %p116, %p117
      %p120 = scmp.ne.s32.totalorder %s105, %s119
      %p121 = scmp.eq.s32.totalorder %s29, 0
      %p122 = por %p120, %p121
      %s124 = sadd.s32 %s123, 1
      %p127 = scmp.eq.s32.totalorder %s23, 3
      %p128 = scmp.ne.s32.totalorder %s123, %s125
      %p129 = scmp.eq.s32.totalorder %s23, 0
      %p130 = por %p128, %p129
      %p131 = scmp.ne.s32.totalorder %s123, %s125
      %p132 = scmp.eq.s32.totalorder %s28, 3
      %p133 = por %p131, %p132
      %p134 = scmp.ne.s32.totalorder %s125, %s126
      %p135 = scmp.eq.s32.totalorder %s28, 0
      %p136 = por %p134, %p135
      %p137 = scmp.ne.s32.totalorder %s125, %s126
      %p138 = scmp.eq.s32.totalorder %s29, 3
      %p139 = por %p137, %p138
      %p141 = scmp.ne.s32.totalorder %s126, %s140
      %p142 = scmp.eq.s32.totalorder %s29, 0
      %p143 = por %p141, %p142
      %s145 = sadd.s32 %s144, 1
      %p148 = scmp.eq.s32.totalorder %s23, 3
      %p149 = scmp.ne.s32.totalorder %s144, %s146
      %p150 = scmp.eq.s32.totalorder %s23, 0
      %p151 = por %p149, %p150
      %p152 = scmp.ne.s32.totalorder %s144, %s146
      %p153 = scmp.eq.s32.totalorder %s28, 3
      %p154 = por %p152, %p153
      %p155 = scmp.ne.s32.totalorder %s146, %s147
      %p156 = scmp.eq.s32.totalorder %s28, 0
      %p157 = por %p155, %p156
      %p158 = scmp.ne.s32.totalorder %s146, %s147
      %p159 = scmp.eq.s32.totalorder %s29, 3
      %p160 = por %p158, %p159
      %p162 = scmp.ne.s32.totalorder %s147, %s161
      %p163 = scmp.eq.s32.totalorder %s29, 0
      %p164 = por %p162, %p163
      %s166 = sadd.s32 %s165, 1
      %p169 = scmp.eq.s32.totalorder %s23, 3
      %p170 = scmp.ne.s32.totalorder %s165, %s167
      %p171 = scmp.eq.s32.totalorder %s23, 0
      %p172 = por %p170, %p171
      %p173 = scmp.ne.s32.totalorder %s165, %s167
      %p174 = scmp.eq.s32.totalorder %s28, 3
      %p175 = por %p173, %p174
      %p176 = scmp.ne.s32.totalorder %s167, %s168
      %p177 = scmp.eq.s32.totalorder %s28, 0
      %p178 = por %p176, %p177
      %p179 = scmp.ne.s32.totalorder %s167, %s168
      %p180 = scmp.eq.s32.totalorder %s29, 3
      %p181 = por %p179, %p180
      %p183 = scmp.ne.s32.totalorder %s168, %s182
      %p184 = scmp.eq.s32.totalorder %s29, 0
      %p185 = por %p183, %p184
      %s187 = sadd.s32 %s186, 1
      %p190 = scmp.eq.s32.totalorder %s23, 3
      %p191 = scmp.ne.s32.totalorder %s186, %s188
      %p192 = scmp.eq.s32.totalorder %s23, 0
      %p193 = por %p191, %p192
      %p194 = scmp.ne.s32.totalorder %s186, %s188
      %p195 = scmp.eq.s32.totalorder %s28, 3
      %p196 = por %p194, %p195
      %p197 = scmp.ne.s32.totalorder %s188, %s189
      %p198 = scmp.eq.s32.totalorder %s28, 0
      %p199 = por %p197, %p198
      %p200 = scmp.ne.s32.totalorder %s188, %s189
      %p201 = scmp.eq.s32.totalorder %s29, 3
      %p202 = por %p200, %p201
      %p204 = scmp.ne.s32.totalorder %s189, %s203
      %p205 = scmp.eq.s32.totalorder %s29, 0
      %p206 = por %p204, %p205
      %s207 = smul.u32 %s31, 2
      %s208 = sadd.s32 %s207, %s32
      %s209 = smul.u32 %s45, 2
      %s210 = sadd.s32 %s209, %s41
      %s211 = ssub.s32 %s208, %s210
      %p212 = scmp.eq.s32.totalorder %s211, 0
      %s214 = sadd.s32 %s213, 1
      %s215 = scalar_select %p212, %s213, %s214
      %p218 = pneg %p212
      %p219 = scmp.eq.s32.totalorder %s23, 3
      %p220 = por %p218, %p219
      %p221 = scmp.ne.s32.totalorder %s213, %s216
      %p222 = scmp.eq.s32.totalorder %s23, 0
      %p223 = por %p221, %p222
      %p224 = scmp.ne.s32.totalorder %s213, %s216
      %p225 = scmp.eq.s32.totalorder %s28, 3
      %p226 = por %p224, %p225
      %p227 = scmp.ne.s32.totalorder %s216, %s217
      %p228 = scmp.eq.s32.totalorder %s28, 0
      %p229 = por %p227, %p228
      %p230 = scmp.ne.s32.totalorder %s216, %s217
      %p231 = scmp.eq.s32.totalorder %s29, 3
      %p232 = por %p230, %p231
      %p234 = scmp.ne.s32.totalorder %s217, %s233
      %p235 = scmp.eq.s32.totalorder %s29, 0
      %p236 = por %p234, %p235
      %s237 = smul.u32 %s31, 2
      %s238 = sadd.s32 %s237, %s32
      %s239 = smul.u32 %s45, 2
      %s240 = sadd.s32 %s239, %s41
      %s241 = ssub.s32 %s238, %s240
      %p242 = scmp.eq.s32.totalorder %s241, 0
      %s244 = sadd.s32 %s243, 1
      %s245 = scalar_select %p242, %s243, %s244
      %p248 = pneg %p242
      %p249 = scmp.eq.s32.totalorder %s23, 3
      %p250 = por %p248, %p249
      %p251 = scmp.ne.s32.totalorder %s243, %s246
      %p252 = scmp.eq.s32.totalorder %s23, 0
      %p253 = por %p251, %p252
      %p254 = scmp.ne.s32.totalorder %s243, %s246
      %p255 = scmp.eq.s32.totalorder %s28, 3
      %p256 = por %p254, %p255
      %p257 = scmp.ne.s32.totalorder %s246, %s247
      %p258 = scmp.eq.s32.totalorder %s28, 0
      %p259 = por %p257, %p258
      %p260 = scmp.ne.s32.totalorder %s246, %s247
      %p261 = scmp.eq.s32.totalorder %s29, 3
      %p262 = por %p260, %p261
      %p264 = scmp.ne.s32.totalorder %s247, %s263
      %p265 = scmp.eq.s32.totalorder %s29, 0
      %p266 = por %p264, %p265
      %s267 = smul.u32 %s31, 2
      %s268 = sadd.s32 %s267, %s32
      %s269 = smul.u32 %s45, 2
      %s270 = sadd.s32 %s269, %s41
      %s271 = ssub.s32 %s30, %s49
      %s272 = ssub.s32 %s268, %s270
      %s273 = sor.u32 %s271, %s272
      %p274 = scmp.eq.s32.totalorder %s273, 0
      %s276 = sadd.s32 %s275, 1
      %s277 = scalar_select %p274, %s275, %s276
      %p280 = pneg %p274
      %p281 = scmp.eq.s32.totalorder %s23, 3
      %p282 = por %p280, %p281
      %p283 = scmp.ne.s32.totalorder %s275, %s278
      %p284 = scmp.eq.s32.totalorder %s23, 0
      %p285 = por %p283, %p284
      %p286 = scmp.ne.s32.totalorder %s275, %s278
      %p287 = scmp.eq.s32.totalorder %s28, 3
      %p288 = por %p286, %p287
      %p289 = scmp.ne.s32.totalorder %s278, %s279
      %p290 = scmp.eq.s32.totalorder %s28, 0
      %p291 = por %p289, %p290
      %p292 = scmp.ne.s32.totalorder %s278, %s279
      %p293 = scmp.eq.s32.totalorder %s29, 3
      %p294 = por %p292, %p293
      %p296 = scmp.ne.s32.totalorder %s279, %s295
      %p297 = scmp.eq.s32.totalorder %s29, 0
      %p298 = por %p296, %p297
      %p299 = scmp.le.s32.totalorder 1, %s23
      %p300 = scmp.lt.s32.totalorder %s23, 5
      %p301 = pnand %p299, %p300
      %p302 = pneg %p301
      // Predicated region
      $region9: #{tpu_custom_call.1} parent=5 // pred_check
        _
      $region10: #{tpu_custom_call.1} parent=5 // pred_check_branch
        %304 = sbr.rel (%p301) target = $region12
      $region11: #{tpu_custom_call.1} parent=5 // pred_region
        %s305 = ssub.s32 %s23, 1
        // Predicated region
        $region13: #{tpu_custom_call.1} parent=11 // pred_check
          %p306 = pneg %p115
        $region14: #{tpu_custom_call.1} parent=11 // pred_check_branch
          %308 = sbr.rel (%p306) target = $region16
        $region15: #{tpu_custom_call.1} parent=11 // pred_region
          %s310 = ssub.s32 512, 512
          %311 = vsyncadd [#allocation4], %s310
          %s312 = sshll.u32 [#allocation3], 4
          %s313 = int_to_ptr.vmem [resolvable:$true] %s312
          %318 = dma.hbm_to_vmem [thread:$0]  %s2, 512, %s313, [#allocation4], 128, 128, 8
        $region16: #{tpu_custom_call.1} parent=11 // pred_fallthru
          _
        // Predicated region
        $region17: #{tpu_custom_call.1} parent=11 // pred_check
          %p319 = pneg %p136
        $region18: #{tpu_custom_call.1} parent=11 // pred_check_branch
          %321 = sbr.rel (%p319) target = $region20
        $region19: #{tpu_custom_call.1} parent=11 // pred_region
          _
        $region20: #{tpu_custom_call.1} parent=11 // pred_fallthru
          _
        // Predicated region
        $region21: #{tpu_custom_call.1} parent=11 // pred_check
          %p322 = pneg %p157
        $region22: #{tpu_custom_call.1} parent=11 // pred_check_branch
          %324 = sbr.rel (%p322) target = $region24
        $region23: #{tpu_custom_call.1} parent=11 // pred_region
          %s326 = ssub.s32 512, 512
          %327 = vsyncadd [#allocation7], %s326
          %s328 = sshll.u32 [#allocation6], 4
          %s329 = int_to_ptr.vmem [resolvable:$true] %s328
          %334 = dma.hbm_to_vmem [thread:$0]  %s4, 512, %s329, [#allocation7], 128, 128, 8
        $region24: #{tpu_custom_call.1} parent=11 // pred_fallthru
          _
        // Predicated region
        $region25: #{tpu_custom_call.1} parent=11 // pred_check
          %p335 = pneg %p178
        $region26: #{tpu_custom_call.1} parent=11 // pred_check_branch
          %337 = sbr.rel (%p335) target = $region28
        $region27: #{tpu_custom_call.1} parent=11 // pred_region
          _
        $region28: #{tpu_custom_call.1} parent=11 // pred_fallthru
          _
        // Predicated region
        $region29: #{tpu_custom_call.1} parent=11 // pred_check
          %p338 = pneg %p199
        $region30: #{tpu_custom_call.1} parent=11 // pred_check_branch
          %340 = sbr.rel (%p338) target = $region32
        $region31: #{tpu_custom_call.1} parent=11 // pred_region
          %s342 = ssub.s32 512, 512
          %343 = vsyncadd [#allocation7], %s342
          %s344 = sshll.u32 [#allocation8], 4
          %s345 = int_to_ptr.vmem [resolvable:$true] %s344
          %350 = dma.hbm_to_vmem [thread:$0]  %s6, 512, %s345, [#allocation7], 128, 128, 8
        $region32: #{tpu_custom_call.1} parent=11 // pred_fallthru
          _
      $region12: #{tpu_custom_call.1} parent=5 // pred_fallthru
        _
      %p351 = scmp.lt.s32.totalorder %s23, 4
      // Predicated region
      $region33: #{tpu_custom_call.1} parent=5 // pred_check
        %p352 = pneg %p351
      $region34: #{tpu_custom_call.1} parent=5 // pred_check_branch
        %354 = sbr.rel (%p352) target = $region36
      $region35: #{tpu_custom_call.1} parent=5 // pred_region
        // Predicated region
        $region37: #{tpu_custom_call.1} parent=35 // pred_check
          %p355 = pneg %p62
        $region38: #{tpu_custom_call.1} parent=35 // pred_check_branch
          %357 = sbr.rel (%p355) target = $region40
        $region39: #{tpu_custom_call.1} parent=35 // pred_region
          %s358 = smul.u32 2, %s30
          %p359 = scmp.lt.s32.totalorder %s358, 3
          %s360 = scalar_select %p359, %s358, 3
          %s361 = smul.addr %s360, 8
          %s362 = scalar_lea.vmem %s0, %s361
          %s363 = smul.u32 2, %s30
        $region40: #{tpu_custom_call.1} parent=35 // pred_fallthru
          _
        // Predicated region
        $region41: #{tpu_custom_call.1} parent=35 // pred_check
          %p364 = pneg %p88
        $region42: #{tpu_custom_call.1} parent=35 // pred_check_branch
          %366 = sbr.rel (%p364) target = $region44
        $region43: #{tpu_custom_call.1} parent=35 // pred_region
          %s367 = smul.u32 2, %s30
          %p368 = scmp.lt.s32.totalorder %s367, 3
          %s369 = scalar_select %p368, %s367, 3
          %s370 = smul.addr %s369, 8
          %s371 = scalar_lea.vmem %s1, %s370
          %s372 = smul.u32 2, %s30
        $region44: #{tpu_custom_call.1} parent=35 // pred_fallthru
          _
        // Predicated region
        $region45: #{tpu_custom_call.1} parent=35 // pred_check
          %p373 = pneg %p223
        $region46: #{tpu_custom_call.1} parent=35 // pred_check_branch
          %375 = sbr.rel (%p373) target = $region48
        $region47: #{tpu_custom_call.1} parent=35 // pred_region
          %s376 = sand.u32 %s213, 1
          %s377 = scalar_lea.sflag [#allocation10], %s376
          %s378 = sand.u32 %s213, 1
          %s379 = smul.addr %s378, 32
          %s380 = scalar_lea.vmem [#allocation9], %s379
          %s381 = smul.u32 %s31, 2
          %s382 = sadd.s32 %s381, %s32
          %s384 = ssub.s32 512, 512
          %385 = vsyncadd %s377, %s384
          %s386 = smul.addr %s382, 128
          %s387 = scalar_lea.hbm %s7, %s386
          %s388 = sshll.u32 %s380, 4
          %s389 = int_to_ptr.vmem [resolvable:$true] %s388
          %394 = dma.hbm_to_vmem [thread:$0]  %s387, 512, %s389, %s377, 256, 128, 8
        $region48: #{tpu_custom_call.1} parent=35 // pred_fallthru
          _
        // Predicated region
        $region49: #{tpu_custom_call.1} parent=35 // pred_check
          %p395 = pneg %p253
        $region50: #{tpu_custom_call.1} parent=35 // pred_check_branch
          %397 = sbr.rel (%p395) target = $region52
        $region51: #{tpu_custom_call.1} parent=35 // pred_region
          %s398 = smul.u32 %s31, 2
          %s399 = sadd.s32 %s398, %s32
          %p400 = scmp.lt.s32.totalorder %s399, 1
          %s401 = scalar_select %p400, %s399, 1
          %s402 = scalar_lea.vmem %s8, %s401
          %s403 = smul.u32 %s31, 2
          %s404 = sadd.s32 %s403, %s32
        $region52: #{tpu_custom_call.1} parent=35 // pred_fallthru
          _
      $region36: #{tpu_custom_call.1} parent=5 // pred_fallthru
        _
      %p405 = scmp.le.s32.totalorder 1, %s23
      %p406 = scmp.lt.s32.totalorder %s23, 5
      %p407 = pnand %p405, %p406
      %p408 = pneg %p407
      // Predicated region
      $region53: #{tpu_custom_call.1} parent=5 // pred_check
        _
      $region54: #{tpu_custom_call.1} parent=5 // pred_check_branch
        %410 = sbr.rel (%p407) target = $region56
      $region55: #{tpu_custom_call.1} parent=5 // pred_region
        %s411 = ssub.s32 %s23, 1
        // Predicated region
        $region57: #{tpu_custom_call.1} parent=55 // pred_check
          %p412 = pneg %p115
        $region58: #{tpu_custom_call.1} parent=55 // pred_check_branch
          %414 = sbr.rel (%p412) target = $region60
        $region59: #{tpu_custom_call.1} parent=55 // pred_region
          %415 = dma.done [#allocation4], 512
        $region60: #{tpu_custom_call.1} parent=55 // pred_fallthru
          _
        // Predicated region
        $region61: #{tpu_custom_call.1} parent=55 // pred_check
          %p416 = pneg %p157
        $region62: #{tpu_custom_call.1} parent=55 // pred_check_branch
          %418 = sbr.rel (%p416) target = $region64
        $region63: #{tpu_custom_call.1} parent=55 // pred_region
          %419 = dma.done [#allocation7], 512
        $region64: #{tpu_custom_call.1} parent=55 // pred_fallthru
          _
        // Predicated region
        $region65: #{tpu_custom_call.1} parent=55 // pred_check
          %p420 = pneg %p199
        $region66: #{tpu_custom_call.1} parent=55 // pred_check_branch
          %422 = sbr.rel (%p420) target = $region68
        $region67: #{tpu_custom_call.1} parent=55 // pred_region
          %423 = dma.done [#allocation7], 512
        $region68: #{tpu_custom_call.1} parent=55 // pred_fallthru
          _
        %s424 = sand.u32 %s216, 1
        %s425 = scalar_lea.sflag [#allocation10], %s424
        %s426 = sand.u32 %s216, 1
        %s427 = smul.addr %s426, 32
        %s428 = scalar_lea.vmem [#allocation9], %s427
        // Predicated region
        $region69: #{tpu_custom_call.1} parent=55 // pred_check
          %p429 = pneg %p229
        $region70: #{tpu_custom_call.1} parent=55 // pred_check_branch
          %431 = sbr.rel (%p429) target = $region72
        $region71: #{tpu_custom_call.1} parent=55 // pred_region
          %432 = dma.done %s425, 512
        $region72: #{tpu_custom_call.1} parent=55 // pred_fallthru
          _
        %s433 = smul.u32 2, %s33
        %p434 = scmp.lt.s32.totalorder %s433, 3
        %s435 = scalar_select %p434, %s433, 3
        %s436 = smul.addr %s435, 8
        %s437 = scalar_lea.vmem %s0, %s436
        %p438 = pneg %p68
        %p439 = pneg %p65
        %s440 = smul.u32 2, %s33
        %p441 = scmp.lt.s32.totalorder %s440, 3
        %s442 = scalar_select %p441, %s440, 3
        %s443 = smul.addr %s442, 8
        %s444 = scalar_lea.vmem %s1, %s443
        %p445 = pneg %p94
        %p446 = pneg %p91
        %p447 = pneg %p115
        %p448 = pneg %p112
        %p449 = pneg %p136
        %p450 = pneg %p133
        %p451 = pneg %p157
        %p452 = pneg %p154
        %p453 = pneg %p178
        %p454 = pneg %p175
        %p455 = pneg %p199
        %p456 = pneg %p196
        %s457 = sand.u32 %s216, 1
        %s458 = scalar_lea.sflag [#allocation10], %s457
        %s459 = sand.u32 %s216, 1
        %s460 = smul.addr %s459, 32
        %s461 = scalar_lea.vmem [#allocation9], %s460
        %p462 = pneg %p229
        %p463 = pneg %p226
        %s464 = smul.u32 %s34, 2
        %s465 = sadd.s32 %s464, %s35
        %p466 = scmp.lt.s32.totalorder %s465, 1
        %s467 = scalar_select %p466, %s465, 1
        %s468 = scalar_lea.vmem %s8, %s467
        %p469 = pneg %p259
        %p470 = pneg %p256
        %p471 = pneg %p291
        %p472 = pneg %p288
        %s473 = sand.u32 %s278, 1
        %s474 = scalar_lea.sflag [#allocation5], %s473
        %s475 = sand.u32 %s278, 1
        %s476 = smul.addr %s475, 16
        %s477 = scalar_lea.vmem [#allocation11], %s476
        %s478 = smul.u32 2, %s33
        %p479 = scmp.lt.s32.totalorder %s478, 3
        %s480 = scalar_select %p479, %s478, 3
        %s481 = smul.addr %s480, 8
        %s482 = scalar_lea.vmem %s0, %s481
        %s483 = smul.u32 2, %s33
        %s484 = smul.u32 2, %s33
        %p485 = scmp.lt.s32.totalorder %s484, 3
        %s486 = scalar_select %p485, %s484, 3
        %s487 = smul.addr %s486, 8
        %s488 = scalar_lea.vmem %s1, %s487
        %s489 = smul.u32 2, %s33
        %s490 = smul.u32 %s34, 2
        %s491 = sadd.s32 %s490, %s35
        %s492 = smul.u32 %s34, 2
        %s493 = sadd.s32 %s492, %s35
        %p494 = scmp.lt.s32.totalorder %s493, 1
        %s495 = scalar_select %p494, %s493, 1
        %s496 = scalar_lea.vmem %s8, %s495
        %s497 = smul.u32 %s34, 2
        %s498 = sadd.s32 %s497, %s35
        %s499 = smul.u32 %s34, 2
        %s500 = sadd.s32 %s499, %s35
        %s501 = smul.u32 2, %s33
        %p502 = scmp.eq.s32.totalorder %s35, 0
        // Predicated region
        $region73: #{tpu_custom_call.1} parent=55 // pred_check
          %p503 = pneg %p502
        $region74: #{tpu_custom_call.1} parent=55 // pred_check_branch
          %505 = sbr.rel (%p503) target = $region76
        $region75: #{tpu_custom_call.1} parent=55 // pred_region
          %v506 = vld [vmem:[%s3] sm:$0x1]
          %v507 = vld [vmem:[%s3 + $0x1] sm:$0x1]
          %v508 = vld [vmem:[%s3 + $0x2] sm:$0x1]
          %v509 = vld [vmem:[%s3 + $0x3] sm:$0x1]
          %v510 = vld [vmem:[%s3 + $0x4] sm:$0x1]
          %v511 = vld [vmem:[%s482] sm:$0xff]
          %v512 = vld [vmem:[%s482 + $0x8] sm:$0xff]
          %v513 = vld [vmem:[#allocation3] sm:$0xff]
          %v514 = vld [vmem:[#allocation3 + $0x8] sm:$0xff]
          %v515 = vld [vmem:[#allocation3 + $0x10] sm:$0xff]
          %v516 = vld [vmem:[#allocation3 + $0x18] sm:$0xff]
          %v517 = vlaneseq
          %v518 = vshrl.u32 %v517, 7
          %v519 = vsub.s32 0, %v518
          %v520 = vrot.slane %v506, %v519
          %vm521 = vcmask 261120
          %v523 = vsel %vm521, %v511, 0
          %v526 = vsel %vm521, %v512, 0
          %528 = vmatprep.subr.mxu0 0.0
          %529 = vmatpush1.msra.mxu0 %v513
          %530 = vmatprep.subr.mxu0 0.0
          %531 = vmatpush1.msra.mxu0 %v514
          %532 = vmatprep.subr.mxu0 0.0
          %533 = vmatpush1.msra.mxu0 %v515
          %534 = vmatprep.subr.mxu0 0.0
          %535 = vmatpush1.msra.mxu0 %v516
          %536 = vmatprep.subr.mxu0 0.0
          %537 = vmatpush1.msra.mxu0 0.0
          %538 = vmatprep.subr.mxu0 0.0
          %539 = vmatpush1.msra.mxu0 0.0
          %540 = vmatprep.subr.mxu0 0.0
          %541 = vmatpush1.msra.mxu0 0.0
          %542 = vmatprep.subr.mxu0 0.0
          %543 = vmatpush1.msra.mxu0 0.0
          %544 = vmatprep.subr.mxu0 0.0
          %545 = vmatpush1.msra.mxu0 0.0
          %546 = vmatprep.subr.mxu0 0.0
          %547 = vmatpush1.msra.mxu0 0.0
          %548 = vmatprep.subr.mxu0 0.0
          %549 = vmatpush1.msra.mxu0 0.0
          %550 = vmatprep.subr.mxu0 0.0
          %551 = vmatpush1.msra.mxu0 0.0
          %552 = vmatprep.subr.mxu0 0.0
          %553 = vmatpush1.msra.mxu0 0.0
          %554 = vmatprep.subr.mxu0 0.0
          %555 = vmatpush1.msra.mxu0 0.0
          %556 = vmatprep.subr.mxu0 0.0
          %557 = vmatpush1.msra.mxu0 0.0
          %558 = vmatprep.subr.mxu0 0.0
          %559 = vmatpush1.msra.mxu0 0.0
          %560 = vmatprep.subr.mxu0 0.0
          %561 = vmatpush1.msra.mxu0 0.0
          %562 = vmatprep.subr.mxu0 0.0
          %563 = vmatpush1.msra.mxu0 0.0
          %564 = vmatprep.subr.mxu0 0.0
          %565 = vmatpush1.msra.mxu0 0.0
          %566 = vmatprep.subr.mxu0 0.0
          %567 = vmatpush1.msra.mxu0 0.0
          %568 = vmatprep.subr.mxu0 0.0
          %569 = vmatpush1.msra.mxu0 0.0
          %570 = vmatprep.subr.mxu0 0.0
          %571 = vmatpush1.msra.mxu0 0.0
          %572 = vmatprep.subr.mxu0 0.0
          %573 = vmatpush1.msra.mxu0 0.0
          %574 = vmatprep.subr.mxu0 0.0
          %575 = vmatpush1.msra.mxu0 0.0
          %576 = vmatprep.subr.mxu0 0.0
          %577 = vmatpush1.msra.mxu0 0.0
          %578 = vmatprep.subr.mxu0 0.0
          %579 = vmatpush1.msra.mxu0 0.0
          %580 = vmatprep.subr.mxu0 0.0
          %581 = vmatpush1.msra.mxu0 0.0
          %582 = vmatprep.subr.mxu0 0.0
          %583 = vmatpush1.msra.mxu0 0.0
          %584 = vmatprep.subr.mxu0 0.0
          %585 = vmatpush1.msra.mxu0 0.0
          %586 = vmatprep.subr.mxu0 0.0
          %587 = vmatpush1.msra.mxu0 0.0
          %588 = vmatprep.subr.mxu0 0.0
          %589 = vmatpush1.msra.mxu0 0.0
          %590 = vmatprep.subr.mxu0 0.0
          %591 = vmatpush1.msra.mxu0 0.0
          %592 = vmatprep.mubr.f32.mxu0 0.0
          %593 = vmatmul.mubr.f32.gmra.mrb[0].mxu0 %v523
          %v594 = vpop.f32.mrb[0].mxu0
          %v595 = vadd.f32 %v520, %v594
          %v596 = vpop.f32.mrb[0].mxu0
          %597 = vmatprep.mubr.f32.mxu0 0.0
          %598 = vmatmul.mubr.f32.gmra.mrb[0].mxu0 %v526
          %v599 = vpop.f32.mrb[0].mxu0
          %v600 = vadd.f32 %v520, %v599
          %v601 = vpop.f32.mrb[0].mxu0
          %602 = vdwg.mxu0
          %v603 = vmul.f32 %v595, 0.5
          %v604 = vmul.f32 %v600, 0.5
          %v605 = vmul.f32 %v595, 0.70710677
          %v606 = vmul.f32 %v600, 0.70710677
          %v607 = verf.f32.pop %v605
          %v608 = verf.f32.pop %v606
          %v609 = vadd.f32 %v607, 1.0
          %v610 = vadd.f32 %v608, 1.0
          %v611 = vmul.f32 %v603, %v609
          %v612 = vmul.f32 %v604, %v610
          %v613 = vsel %vm521, %v611, 0.0
          %614 = vadd.xlane.f32.xlu0 %v613
          %v615 = vpop.xlane.xlu0 %614
          %v616 = vsel %vm521, %v612, 0.0
          %617 = vadd.xlane.f32.xlu0 %v616
          %v618 = vpop.xlane.xlu0 %617
          %v619 = vrcp.pop 32.0
          %v620 = vmul.f32 %v615, %v619
          %v621 = vmul.f32 %v618, %v619
          %v622 = vsub.f32 %v611, %v620
          %v623 = vsub.f32 %v612, %v621
          %v624 = vmul.f32 %v622, %v622
          %v625 = vmul.f32 %v623, %v623
          %v626 = vsel %vm521, %v624, 0.0
          %627 = vadd.xlane.f32.xlu0 %v626
          %v628 = vpop.xlane.xlu0 %627
          %v629 = vsel %vm521, %v625, 0.0
          %630 = vadd.xlane.f32.xlu0 %v629
          %v631 = vpop.xlane.xlu0 %630
          %v632 = vmul.f32 %v628, %v619
          %v633 = vmul.f32 %v631, %v619
          %v634 = vadd.f32 %v632, 1e-12
          %v635 = vadd.f32 %v633, 1e-12
          %v636 = vrsqrt.pop %v634
          %v637 = vrsqrt.pop %v635
          %v638 = vmul.f32 %v622, %v636
          %v639 = vmul.f32 %v623, %v637
          %v640 = vlaneseq
          %v641 = vshrl.u32 %v640, 7
          %v642 = vsub.s32 0, %v641
          %v643 = vrot.slane %v507, %v642
          %v644 = vmul.f32 %v638, %v643
          %v645 = vmul.f32 %v639, %v643
          %v646 = vlaneseq
          %v647 = vshrl.u32 %v646, 7
          %v648 = vsub.s32 0, %v647
          %v649 = vrot.slane %v508, %v648
          %v650 = vadd.f32 %v644, %v649
          %v651 = vadd.f32 %v645, %v649
          %v652 = vld [vmem:[#allocation6] sm:$0xff]
          %v653 = vld [vmem:[#allocation6 + $0x8] sm:$0xff]
          %v654 = vld [vmem:[#allocation6 + $0x10] sm:$0xff]
          %v655 = vld [vmem:[#allocation6 + $0x18] sm:$0xff]
          %v656 = vld [vmem:[%s488] sm:$0xff]
          %v657 = vld [vmem:[%s488 + $0x8] sm:$0xff]
          %v658 = vld [vmem:[%s5] sm:$0xf]
          %vm659 = vcmask 31744
          %v661 = vsel %vm659, %v656, 0
          %v664 = vsel %vm659, %v657, 0
          %vm666 = vcmask 1043456
          %v668 = vsel %vm666, %v658, 0
          %670 = vmatprep.subr.mxu0 0.0
          %671 = vmatpush1.msra.mxu0 %v668
          %672 = vmatprep.subr.mxu0 0.0
          %673 = vmatpush1.msra.mxu0 0.0
          %674 = vmatprep.subr.mxu0 0.0
          %675 = vmatpush1.msra.mxu0 0.0
          %676 = vmatprep.subr.mxu0 0.0
          %677 = vmatpush1.msra.mxu0 0.0
          %678 = vmatprep.subr.mxu0 0.0
          %679 = vmatpush1.msra.mxu0 0.0
          %680 = vmatprep.subr.mxu0 0.0
          %681 = vmatpush1.msra.mxu0 0.0
          %682 = vmatprep.subr.mxu0 0.0
          %683 = vmatpush1.msra.mxu0 0.0
          %684 = vmatprep.subr.mxu0 0.0
          %685 = vmatpush1.msra.mxu0 0.0
          %686 = vmatprep.subr.mxu0 0.0
          %687 = vmatpush1.msra.mxu0 0.0
          %688 = vmatprep.subr.mxu0 0.0
          %689 = vmatpush1.msra.mxu0 0.0
          %690 = vmatprep.subr.mxu0 0.0
          %691 = vmatpush1.msra.mxu0 0.0
          %692 = vmatprep.subr.mxu0 0.0
          %693 = vmatpush1.msra.mxu0 0.0
          %694 = vmatprep.subr.mxu0 0.0
          %695 = vmatpush1.msra.mxu0 0.0
          %696 = vmatprep.subr.mxu0 0.0
          %697 = vmatpush1.msra.mxu0 0.0
          %698 = vmatprep.subr.mxu0 0.0
          %699 = vmatpush1.msra.mxu0 0.0
          %700 = vmatprep.subr.mxu0 0.0
          %701 = vmatpush1.msra.mxu0 0.0
          %702 = vmatprep.subr.mxu0 0.0
          %703 = vmatpush1.msra.mxu0 0.0
          %704 = vmatprep.subr.mxu0 0.0
          %705 = vmatpush1.msra.mxu0 0.0
          %706 = vmatprep.subr.mxu0 0.0
          %707 = vmatpush1.msra.mxu0 0.0
          %708 = vmatprep.subr.mxu0 0.0
          %709 = vmatpush1.msra.mxu0 0.0
          %710 = vmatprep.subr.mxu0 0.0
          %711 = vmatpush1.msra.mxu0 0.0
          %712 = vmatprep.subr.mxu0 0.0
          %713 = vmatpush1.msra.mxu0 0.0
          %714 = vmatprep.subr.mxu0 0.0
          %715 = vmatpush1.msra.mxu0 0.0
          %716 = vmatprep.subr.mxu0 0.0
          %717 = vmatpush1.msra.mxu0 0.0
          %718 = vmatprep.subr.mxu0 0.0
          %719 = vmatpush1.msra.mxu0 0.0
          %720 = vmatprep.subr.mxu0 0.0
          %721 = vmatpush1.msra.mxu0 0.0
          %722 = vmatprep.subr.mxu0 0.0
          %723 = vmatpush1.msra.mxu0 0.0
          %724 = vmatprep.subr.mxu0 0.0
          %725 = vmatpush1.msra.mxu0 0.0
          %726 = vmatprep.subr.mxu0 0.0
          %727 = vmatpush1.msra.mxu0 0.0
          %728 = vmatprep.subr.mxu0 0.0
          %729 = vmatpush1.msra.mxu0 0.0
          %730 = vmatprep.subr.mxu0 0.0
          %731 = vmatpush1.msra.mxu0 0.0
          %732 = vmatprep.subr.mxu0 0.0
          %733 = vmatpush1.msra.mxu0 0.0
          %734 = vmatprep.mubr.f32.mxu0 0.0
          %735 = vmatmul.mubr.f32.gmra.mrb[0].mxu0 %v661
          %v736 = vpop.f32.mrb[0].mxu0
          %v737 = vadd.f32 0.0, %v736
          %v738 = vpop.f32.mrb[0].mxu0
          %739 = vmatprep.mubr.f32.mxu0 0.0
          %740 = vmatmul.mubr.f32.gmra.mrb[0].mxu0 %v664
          %v741 = vpop.f32.mrb[0].mxu0
          %v742 = vadd.f32 0.0, %v741
          %v743 = vpop.f32.mrb[0].mxu0
          %744 = vdwg.mxu0
          %v746 = vsel %vm521, %v650, 0
          %v749 = vsel %vm521, %v651, 0
          %751 = vmatprep.subr.mxu0 0.0
          %752 = vmatpush1.msra.mxu0 %v652
          %753 = vmatprep.subr.mxu0 0.0
          %754 = vmatpush1.msra.mxu0 %v653
          %755 = vmatprep.subr.mxu0 0.0
          %756 = vmatpush1.msra.mxu0 %v654
          %757 = vmatprep.subr.mxu0 0.0
          %758 = vmatpush1.msra.mxu0 %v655
          %759 = vmatprep.subr.mxu0 0.0
          %760 = vmatpush1.msra.mxu0 0.0
          %761 = vmatprep.subr.mxu0 0.0
          %762 = vmatpush1.msra.mxu0 0.0
          %763 = vmatprep.subr.mxu0 0.0
          %764 = vmatpush1.msra.mxu0 0.0
          %765 = vmatprep.subr.mxu0 0.0
          %766 = vmatpush1.msra.mxu0 0.0
          %767 = vmatprep.subr.mxu0 0.0
          %768 = vmatpush1.msra.mxu0 0.0
          %769 = vmatprep.subr.mxu0 0.0
          %770 = vmatpush1.msra.mxu0 0.0
          %771 = vmatprep.subr.mxu0 0.0
          %772 = vmatpush1.msra.mxu0 0.0
          %773 = vmatprep.subr.mxu0 0.0
          %774 = vmatpush1.msra.mxu0 0.0
          %775 = vmatprep.subr.mxu0 0.0
          %776 = vmatpush1.msra.mxu0 0.0
          %777 = vmatprep.subr.mxu0 0.0
          %778 = vmatpush1.msra.mxu0 0.0
          %779 = vmatprep.subr.mxu0 0.0
          %780 = vmatpush1.msra.mxu0 0.0
          %781 = vmatprep.subr.mxu0 0.0
          %782 = vmatpush1.msra.mxu0 0.0
          %783 = vmatprep.subr.mxu0 0.0
          %784 = vmatpush1.msra.mxu0 0.0
          %785 = vmatprep.subr.mxu0 0.0
          %786 = vmatpush1.msra.mxu0 0.0
          %787 = vmatprep.subr.mxu0 0.0
          %788 = vmatpush1.msra.mxu0 0.0
          %789 = vmatprep.subr.mxu0 0.0
          %790 = vmatpush1.msra.mxu0 0.0
          %791 = vmatprep.subr.mxu0 0.0
          %792 = vmatpush1.msra.mxu0 0.0
          %793 = vmatprep.subr.mxu0 0.0
          %794 = vmatpush1.msra.mxu0 0.0
          %795 = vmatprep.subr.mxu0 0.0
          %796 = vmatpush1.msra.mxu0 0.0
          %797 = vmatprep.subr.mxu0 0.0
          %798 = vmatpush1.msra.mxu0 0.0
          %799 = vmatprep.subr.mxu0 0.0
          %800 = vmatpush1.msra.mxu0 0.0
          %801 = vmatprep.subr.mxu0 0.0
          %802 = vmatpush1.msra.mxu0 0.0
          %803 = vmatprep.subr.mxu0 0.0
          %804 = vmatpush1.msra.mxu0 0.0
          %805 = vmatprep.subr.mxu0 0.0
          %806 = vmatpush1.msra.mxu0 0.0
          %807 = vmatprep.subr.mxu0 0.0
          %808 = vmatpush1.msra.mxu0 0.0
          %809 = vmatprep.subr.mxu0 0.0
          %810 = vmatpush1.msra.mxu0 0.0
          %811 = vmatprep.subr.mxu0 0.0
          %812 = vmatpush1.msra.mxu0 0.0
          %813 = vmatprep.subr.mxu0 0.0
          %814 = vmatpush1.msra.mxu0 0.0
          %815 = vmatprep.mubr.f32.mxu0 0.0
          %816 = vmatmul.mubr.f32.gmra.mrb[0].mxu0 %v746
          %v817 = vpop.f32.mrb[0].mxu0
          %v818 = vadd.f32 %v737, %v817
          %v819 = vpop.f32.mrb[0].mxu0
          %820 = vmatprep.mubr.f32.mxu0 0.0
          %821 = vmatmul.mubr.f32.gmra.mrb[0].mxu0 %v749
          %v822 = vpop.f32.mrb[0].mxu0
          %v823 = vadd.f32 %v742, %v822
          %v824 = vpop.f32.mrb[0].mxu0
          %825 = vdwg.mxu0
          %v826 = vlaneseq
          %v827 = vshrl.u32 %v826, 7
          %v828 = vsub.s32 0, %v827
          %v829 = vrot.slane %v509, %v828
          %v830 = vadd.f32 %v818, %v829
          %v831 = vadd.f32 %v823, %v829
          %v832 = vmax.f32 %v830, 0.0
          %v833 = vmax.f32 %v831, 0.0
          %v834 = vld [vmem:[#allocation8] sm:$0xff]
          %v835 = vld [vmem:[#allocation8 + $0x8] sm:$0xff]
          %v836 = vld [vmem:[#allocation8 + $0x10] sm:$0xff]
          %v837 = vld [vmem:[#allocation8 + $0x18] sm:$0xff]
          %v838 = vlaneseq
          %v839 = vshrl.u32 %v838, 7
          %v840 = vsub.s32 0, %v839
          %v841 = vrot.slane %v510, %v840
          %v843 = vsel %vm521, %v832, 0
          %v846 = vsel %vm521, %v833, 0
          %848 = vmatprep.subr.mxu0 0.0
          %849 = vmatpush1.msra.mxu0 %v834
          %850 = vmatprep.subr.mxu0 0.0
          %851 = vmatpush1.msra.mxu0 %v835
          %852 = vmatprep.subr.mxu0 0.0
          %853 = vmatpush1.msra.mxu0 %v836
          %854 = vmatprep.subr.mxu0 0.0
          %855 = vmatpush1.msra.mxu0 %v837
          %856 = vmatprep.subr.mxu0 0.0
          %857 = vmatpush1.msra.mxu0 0.0
          %858 = vmatprep.subr.mxu0 0.0
          %859 = vmatpush1.msra.mxu0 0.0
          %860 = vmatprep.subr.mxu0 0.0
          %861 = vmatpush1.msra.mxu0 0.0
          %862 = vmatprep.subr.mxu0 0.0
          %863 = vmatpush1.msra.mxu0 0.0
          %864 = vmatprep.subr.mxu0 0.0
          %865 = vmatpush1.msra.mxu0 0.0
          %866 = vmatprep.subr.mxu0 0.0
          %867 = vmatpush1.msra.mxu0 0.0
          %868 = vmatprep.subr.mxu0 0.0
          %869 = vmatpush1.msra.mxu0 0.0
          %870 = vmatprep.subr.mxu0 0.0
          %871 = vmatpush1.msra.mxu0 0.0
          %872 = vmatprep.subr.mxu0 0.0
          %873 = vmatpush1.msra.mxu0 0.0
          %874 = vmatprep.subr.mxu0 0.0
          %875 = vmatpush1.msra.mxu0 0.0
          %876 = vmatprep.subr.mxu0 0.0
          %877 = vmatpush1.msra.mxu0 0.0
          %878 = vmatprep.subr.mxu0 0.0
          %879 = vmatpush1.msra.mxu0 0.0
          %880 = vmatprep.subr.mxu0 0.0
          %881 = vmatpush1.msra.mxu0 0.0
          %882 = vmatprep.subr.mxu0 0.0
          %883 = vmatpush1.msra.mxu0 0.0
          %884 = vmatprep.subr.mxu0 0.0
          %885 = vmatpush1.msra.mxu0 0.0
          %886 = vmatprep.subr.mxu0 0.0
          %887 = vmatpush1.msra.mxu0 0.0
          %888 = vmatprep.subr.mxu0 0.0
          %889 = vmatpush1.msra.mxu0 0.0
          %890 = vmatprep.subr.mxu0 0.0
          %891 = vmatpush1.msra.mxu0 0.0
          %892 = vmatprep.subr.mxu0 0.0
          %893 = vmatpush1.msra.mxu0 0.0
          %894 = vmatprep.subr.mxu0 0.0
          %895 = vmatpush1.msra.mxu0 0.0
          %896 = vmatprep.subr.mxu0 0.0
          %897 = vmatpush1.msra.mxu0 0.0
          %898 = vmatprep.subr.mxu0 0.0
          %899 = vmatpush1.msra.mxu0 0.0
          %900 = vmatprep.subr.mxu0 0.0
          %901 = vmatpush1.msra.mxu0 0.0
          %902 = vmatprep.subr.mxu0 0.0
          %903 = vmatpush1.msra.mxu0 0.0
          %904 = vmatprep.subr.mxu0 0.0
          %905 = vmatpush1.msra.mxu0 0.0
          %906 = vmatprep.subr.mxu0 0.0
          %907 = vmatpush1.msra.mxu0 0.0
          %908 = vmatprep.subr.mxu0 0.0
          %909 = vmatpush1.msra.mxu0 0.0
          %910 = vmatprep.subr.mxu0 0.0
          %911 = vmatpush1.msra.mxu0 0.0
          %912 = vmatprep.mubr.f32.mxu0 0.0
          %913 = vmatmul.mubr.f32.gmra.mrb[0].mxu0 %v843
          %v914 = vpop.f32.mrb[0].mxu0
          %v915 = vadd.f32 %v841, %v914
          %v916 = vpop.f32.mrb[0].mxu0
          %917 = vmatprep.mubr.f32.mxu0 0.0
          %918 = vmatmul.mubr.f32.gmra.mrb[0].mxu0 %v846
          %v919 = vpop.f32.mrb[0].mxu0
          %v920 = vadd.f32 %v841, %v919
          %v921 = vpop.f32.mrb[0].mxu0
          %922 = vdwg.mxu0
          %v923 = vmax.f32 %v915, 0.0
          %v924 = vmax.f32 %v920, 0.0
          %925 = vst.msk [vmem:[#allocation2] sm:$0xff] %vm521, %v923
          %926 = vst.msk [vmem:[#allocation2 + $0x8] sm:$0xff] %vm521, %v924
        $region76: #{tpu_custom_call.1} parent=55 // pred_fallthru
          _
        %v927 = vld [vmem:[#allocation2] sm:$0xff]
        %v928 = vld [vmem:[#allocation2 + $0x8] sm:$0xff]
        %v929 = vld [vmem:[%s428] sm:$0xff]
        %v930 = vld [vmem:[%s428 + $0x8] sm:$0xff]
        %v931 = vld [vmem:[%s428 + $0x10] sm:$0xff]
        %v932 = vld [vmem:[%s428 + $0x18] sm:$0xff]
        %v933 = vld [vmem:[%s496] sm:$0x1]
        %v935 = vlaneseq
        %v936 = vshrl.u32 %v935, 7
        %v937 = vsub.s32 0, %v936
        %v938 = vrot.slane %v933, %v937
        %vm940 = vcmask 261120
        %v942 = vsel %vm940, %v927, 0
        %v945 = vsel %vm940, %v928, 0
        %947 = vmatprep.subr.mxu0 0.0
        %948 = vmatpush1.msra.mxu0 %v929
        %949 = vmatprep.subr.mxu0 0.0
        %950 = vmatpush1.msra.mxu0 %v930
        %951 = vmatprep.subr.mxu0 0.0
        %952 = vmatpush1.msra.mxu0 %v931
        %953 = vmatprep.subr.mxu0 0.0
        %954 = vmatpush1.msra.mxu0 %v932
        %955 = vmatprep.subr.mxu0 0.0
        %956 = vmatpush1.msra.mxu0 0.0
        %957 = vmatprep.subr.mxu0 0.0
        %958 = vmatpush1.msra.mxu0 0.0
        %959 = vmatprep.subr.mxu0 0.0
        %960 = vmatpush1.msra.mxu0 0.0
        %961 = vmatprep.subr.mxu0 0.0
        %962 = vmatpush1.msra.mxu0 0.0
        %963 = vmatprep.subr.mxu0 0.0
        %964 = vmatpush1.msra.mxu0 0.0
        %965 = vmatprep.subr.mxu0 0.0
        %966 = vmatpush1.msra.mxu0 0.0
        %967 = vmatprep.subr.mxu0 0.0
        %968 = vmatpush1.msra.mxu0 0.0
        %969 = vmatprep.subr.mxu0 0.0
        %970 = vmatpush1.msra.mxu0 0.0
        %971 = vmatprep.subr.mxu0 0.0
        %972 = vmatpush1.msra.mxu0 0.0
        %973 = vmatprep.subr.mxu0 0.0
        %974 = vmatpush1.msra.mxu0 0.0
        %975 = vmatprep.subr.mxu0 0.0
        %976 = vmatpush1.msra.mxu0 0.0
        %977 = vmatprep.subr.mxu0 0.0
        %978 = vmatpush1.msra.mxu0 0.0
        %979 = vmatprep.subr.mxu0 0.0
        %980 = vmatpush1.msra.mxu0 0.0
        %981 = vmatprep.subr.mxu0 0.0
        %982 = vmatpush1.msra.mxu0 0.0
        %983 = vmatprep.subr.mxu0 0.0
        %984 = vmatpush1.msra.mxu0 0.0
        %985 = vmatprep.subr.mxu0 0.0
        %986 = vmatpush1.msra.mxu0 0.0
        %987 = vmatprep.subr.mxu0 0.0
        %988 = vmatpush1.msra.mxu0 0.0
        %989 = vmatprep.subr.mxu0 0.0
        %990 = vmatpush1.msra.mxu0 0.0
        %991 = vmatprep.subr.mxu0 0.0
        %992 = vmatpush1.msra.mxu0 0.0
        %993 = vmatprep.subr.mxu0 0.0
        %994 = vmatpush1.msra.mxu0 0.0
        %995 = vmatprep.subr.mxu0 0.0
        %996 = vmatpush1.msra.mxu0 0.0
        %997 = vmatprep.subr.mxu0 0.0
        %998 = vmatpush1.msra.mxu0 0.0
        %999 = vmatprep.subr.mxu0 0.0
        %1000 = vmatpush1.msra.mxu0 0.0
        %1001 = vmatprep.subr.mxu0 0.0
        %1002 = vmatpush1.msra.mxu0 0.0
        %1003 = vmatprep.subr.mxu0 0.0
        %1004 = vmatpush1.msra.mxu0 0.0
        %1005 = vmatprep.subr.mxu0 0.0
        %1006 = vmatpush1.msra.mxu0 0.0
        %1007 = vmatprep.subr.mxu0 0.0
        %1008 = vmatpush1.msra.mxu0 0.0
        %1009 = vmatprep.subr.mxu0 0.0
        %1010 = vmatpush1.msra.mxu0 0.0
        %1011 = vmatprep.mubr.f32.mxu0 0.0
        %1012 = vmatmul.mubr.f32.gmra.mrb[0].mxu0 %v942
        %v1013 = vpop.f32.mrb[0].mxu0
        %v1014 = vadd.f32 %v938, %v1013
        %v1015 = vpop.f32.mrb[0].mxu0
        %1016 = vmatprep.mubr.f32.mxu0 0.0
        %1017 = vmatmul.mubr.f32.gmra.mrb[0].mxu0 %v945
        %v1018 = vpop.f32.mrb[0].mxu0
        %v1019 = vadd.f32 %v938, %v1018
        %v1020 = vpop.f32.mrb[0].mxu0
        %1021 = vdwg.mxu0
        %1022 = vst [vmem:[%s477] sm:$0xff] %v1014
        %1023 = vst [vmem:[%s477 + $0x8] sm:$0xff] %v1019
        %s1024 = sand.u32 %s278, 1
        %s1025 = scalar_lea.sflag [#allocation5], %s1024
        %s1026 = sand.u32 %s278, 1
        %s1027 = smul.addr %s1026, 16
        %s1028 = scalar_lea.vmem [#allocation11], %s1027
        // Predicated region
        $region77: #{tpu_custom_call.1} parent=55 // pred_check
          %p1029 = pneg %p288
        $region78: #{tpu_custom_call.1} parent=55 // pred_check_branch
          %1031 = sbr.rel (%p1029) target = $region80
        $region79: #{tpu_custom_call.1} parent=55 // pred_region
          %s1032 = smul.u32 %s34, 2
          %s1033 = sadd.s32 %s1032, %s35
          %s1034 = smul.u32 2, %s33
          %s1036 = ssub.s32 256, 256
          %1037 = vsyncadd %s1025, %s1036
          %s1038 = smul.addr %s1034, 2
          %s1039 = sadd.s32 %s1033, %s1038
          %s1040 = smul.addr %s1039, 128
          %s1041 = scalar_lea.hbm %s9, %s1040
          %s1042 = sshll.u32 %s1028, 4
          %s1043 = int_to_ptr.vmem [resolvable:$true] %s1042
          %1048 = dma.vmem_to_hbm [thread:$0]  %s1043, 256, %s1041, %s1025, 128, 256, 8
        $region80: #{tpu_custom_call.1} parent=55 // pred_fallthru
          _
      $region56: #{tpu_custom_call.1} parent=5 // pred_fallthru
        _
      %p1049 = scmp.le.s32.totalorder 2, %s23
      // Predicated region
      $region81: #{tpu_custom_call.1} parent=5 // pred_check
        %p1050 = pneg %p1049
      $region82: #{tpu_custom_call.1} parent=5 // pred_check_branch
        %1052 = sbr.rel (%p1050) target = $region84
      $region83: #{tpu_custom_call.1} parent=5 // pred_region
        %s1053 = ssub.s32 %s23, 2
        // Predicated region
        $region85: #{tpu_custom_call.1} parent=83 // pred_check
          %p1054 = pneg %p294
        $region86: #{tpu_custom_call.1} parent=83 // pred_check_branch
          %1056 = sbr.rel (%p1054) target = $region88
        $region87: #{tpu_custom_call.1} parent=83 // pred_region
          %s1057 = sand.u32 %s279, 1
          %s1058 = scalar_lea.sflag [#allocation5], %s1057
          %s1059 = sand.u32 %s279, 1
          %s1060 = smul.addr %s1059, 16
          %s1061 = scalar_lea.vmem [#allocation11], %s1060
          %1062 = dma.done %s1058, 256
        $region88: #{tpu_custom_call.1} parent=83 // pred_fallthru
          _
      $region84: #{tpu_custom_call.1} parent=5 // pred_fallthru
        _
    $region6: #{tpu_custom_call.1} parent=1 // loop_footer
      %s27 = sadd.s32 1, %s23
    $region7: #{tpu_custom_call.1} parent=1 // loop_footer_branch
      %22 = sbr.rel target = $region3
    $region8: #{tpu_custom_call.1} parent=1 // loop_exit
      _
    %1063 = vsyncpa [#allocation4], 1
    %s1064 = scalar_lea.sflag [#allocation4], 1
    %1065 = vsyncpa %s1064, 1
    %1066 = vsyncpa [#allocation7], 1
    %1067 = vsyncpa [#allocation10], 1
    %s1068 = scalar_lea.sflag [#allocation10], 1
    %1069 = vsyncpa %s1068, 1
    %1070 = vsyncpa [#allocation5], 1
    %s1071 = scalar_lea.sflag [#allocation5], 1
    %1072 = vsyncpa %s1071, 1

</llo_original>
